<compile_context>
chip_gen: v7x
topology: tpu7x:2x2x1
jax: 0.10.0
libtpu: 0.0.40
codegen_flags: <defaults>
</compile_context>

<pallas_src>
import math
import functools

import jax
import jax.numpy as jnp
from jax.experimental import pallas as pl
from jax.experimental.pallas import tpu as pltpu

TIME_VOCABS = (12, 31, 24, 4, 7)      # month, day, hour, ?, weekday
EMB_DIM = 4
N_TIME = len(TIME_VOCABS)
TIME_WIDTH = EMB_DIM * N_TIME         # 20
TOTAL_VOCAB = sum(TIME_VOCABS)        # 78

_offsets = []
_o = 0
for _v in TIME_VOCABS:
    _offsets.append(_o)
    _o += _v
VOCAB_OFFSETS = tuple(_offsets)       # (0, 12, 43, 67, 71)


def _round_up(a, b):
    return ((a + b - 1) // b) * b


def _feature_emb_kernel(x_ref, pa_ref, table_ref, cxt_ref, pa_out_ref, time_ref):
    """One (tile, F) tile of flattened rows -> three per-row outputs.

    x_ref:      (tm, F)   f32  raw features (int-valued cols 0, 4..8)
    pa_ref:     (tm, P)   f32  pa_onehot tile
    table_ref:  (78, 20)  f32  block-diagonal concat of the 5 emb tables
    cxt_ref:    (tm, 2)   f32  X[..., 2:4] passthrough
    pa_out_ref: (tm, P)   f32  pa_onehot with scatter(idx)=1.0
    time_ref:   (tm, 20)  f32  concatenated time embeddings
    """
    x = x_ref[...]                                       # (tm, F)
    tm = x.shape[0]
    P = pa_out_ref.shape[-1]

    # --- X_cxt = X[..., 2:4] — single full-block store --------------------
    cxt_ref[...] = x[:, 2:4]

    # --- X_pa = pa_onehot.scatter_(-1, X[..., :1].long(), 1.0) ------------
    pa_idx = x[:, 0:1].astype(jnp.int32)                             # (tm, 1)
    lane_p = jax.lax.broadcasted_iota(jnp.int32, (tm, P), 1)         # (tm, P)
    pa_out_ref[...] = jnp.where(lane_p == pa_idx,
                                jnp.float32(1.0), pa_ref[...])

    # --- X_time: ONE fused one-hot (tm, 78) @ block-diag table (78, 20) ---
    # Single iota; 5 cheap VPU compares against offset-shifted indices OR'd
    # together, then one MXU push.  One-hot matmul reproduces the gather
    # exactly in f32.
    lane_v = jax.lax.broadcasted_iota(jnp.int32, (tm, TOTAL_VOCAB), 1)
    hit = None
    for i, off in enumerate(VOCAB_OFFSETS):
        gidx = x[:, i + 4:i + 5].astype(jnp.int32) + off             # (tm, 1)
        eq = lane_v == gidx
        hit = eq if hit is None else (hit | eq)
    onehot = hit.astype(jnp.float32)                                 # (tm, 78)
    time_ref[...] = jnp.dot(onehot, table_ref[...],
                            preferred_element_type=jnp.float32)      # (tm, 20)


def init_feature_emb_params(key):
    """Deterministic xavier_uniform(gain=sqrt(2)) init of the 5 tables."""
    tables = []
    for vocab in TIME_VOCABS:
        key, sub = jax.random.split(key)
        fan_in, fan_out = EMB_DIM, vocab   # torch: fan_in=size(1), fan_out=size(0)
        bound = math.sqrt(2.0) * math.sqrt(6.0 / (fan_in + fan_out))
        tables.append(jax.random.uniform(sub, (vocab, EMB_DIM),
                                         dtype=jnp.float32,
                                         minval=-bound, maxval=bound))
    return tuple(tables)


def build_blockdiag_table(emb_tables):
    """Stack the 5 (V_i, 4) tables block-diagonally into one (78, 20) table."""
    table = jnp.zeros((TOTAL_VOCAB, TIME_WIDTH), jnp.float32)
    for i, (off, t) in enumerate(zip(VOCAB_OFFSETS, emb_tables)):
        table = table.at[off:off + t.shape[0],
                         i * EMB_DIM:(i + 1) * EMB_DIM].set(t.astype(jnp.float32))
    return table


def _default_tile_m():
    """Generation-aware row-tile default."""
    try:
        kind = jax.devices()[0].device_kind.lower()
    except Exception:
        kind = ""
    if "v5" in kind:
        return 2048          # v5e: 1 vst slot, small default scoped VMEM
    if "v6" in kind:
        return 8192          # v6e: 128 MiB VMEM; amortize ~0.35 us/step
    return 4096              # v7x (64 MiB VMEM) and unknown chips: moderate


def _vmem_limit_bytes(tile):
    # 5 tile-sized blocks (x, pa, cxt, pa_out, time), each 128-lane padded f32
    # and double-buffered, plus ~4 tile-sized f32 temporaries (iota / one-hot /
    # compares) and the tiny table; 1.5x margin, clamped to a safe range.
    per_row = 5 * 128 * 4 * 2 + 4 * 128 * 4
    est = tile * per_row + (1 << 20)
    return int(min(max(est * 3 // 2, 32 << 20), 112 << 20))


@functools.partial(jax.jit, static_argnames=("tile_m",))
def feature_emb_forward(X, pa_onehot, emb_tables, tile_m=None):
    """Pallas implementation of FeatureEmb.forward.

    X:         (B, N, T_in, F) float32, F >= 9
    pa_onehot: (B, N, T_in, P) float32
    Returns (X_cxt, X_pa, X_time): (B,N,T,2), (B,N,T,P), (B,N,T,20).
    """
    B, N, T, F = X.shape
    P = pa_onehot.shape[-1]
    M = B * N * T

    if tile_m is None:
        tile_m = _default_tile_m()

    # Clamp the tile to the (8-rounded) row count; keep >= 2 grid steps so
    # both v7x TensorCores get work (the single grid axis is "parallel").
    tile = min(tile_m, _round_up(M, 8))
    if M > 8:
        tile = min(tile, _round_up((M + 1) // 2, 8))
    grid = pl.cdiv(M, tile)   # ragged M handled by the partial last block

    x_flat = X.reshape(M, F).astype(jnp.float32)        # metadata-only
    pa_flat = pa_onehot.reshape(M, P).astype(jnp.float32)
    table = build_blockdiag_table(emb_tables)

    cxt, pa_out, time_out = pl.pallas_call(
        _feature_emb_kernel,
        out_shape=(
            jax.ShapeDtypeStruct((M, 2), jnp.float32),
            jax.ShapeDtypeStruct((M, P), jnp.float32),
            jax.ShapeDtypeStruct((M, TIME_WIDTH), jnp.float32),
        ),
        grid_spec=pltpu.PrefetchScalarGridSpec(
            num_scalar_prefetch=0,
            grid=(grid,),
            in_specs=[
                pl.BlockSpec((tile, F), lambda i: (i, 0)),
                pl.BlockSpec((tile, P), lambda i: (i, 0)),
                pl.BlockSpec((TOTAL_VOCAB, TIME_WIDTH), lambda i: (0, 0)),
            ],
            out_specs=[
                pl.BlockSpec((tile, 2), lambda i: (i, 0)),
                pl.BlockSpec((tile, P), lambda i: (i, 0)),
                pl.BlockSpec((tile, TIME_WIDTH), lambda i: (i, 0)),
            ],
        ),
        compiler_params=pltpu.CompilerParams(
            dimension_semantics=("parallel",),
            vmem_limit_bytes=_vmem_limit_bytes(tile)),
    )(x_flat, pa_flat, table)

    # reshapes of contiguous row-major arrays are free (no extra HBM pass)
    return (cxt.reshape(B, N, T, 2),
            pa_out.reshape(B, N, T, P),
            time_out.reshape(B, N, T, TIME_WIDTH))


def _reference_forward(X, pa_onehot, emb_tables):
    """Pure-JAX reference mirroring the PyTorch semantics."""
    X_time = jnp.concatenate(
        [tbl[X[..., i + 4].astype(jnp.int32)] for i, tbl in enumerate(emb_tables)],
        axis=-1)
    X_cxt = X[..., 2:4]
    idx = X[..., 0:1].astype(jnp.int32)
    lane = jax.lax.broadcasted_iota(jnp.int32, pa_onehot.shape, pa_onehot.ndim - 1)
    X_pa = jnp.where(lane == idx, 1.0, pa_onehot)
    return X_cxt, X_pa, X_time


def _make_inputs(key, B, N, T, F, P):
    k_float, k_t0, k_t1, k_t2, k_t3, k_t4, k_pa, k_paoh = jax.random.split(key, 8)
    X = jax.random.uniform(k_float, (B, N, T, F), dtype=jnp.float32)
    pa_idx = jax.random.randint(k_pa, (B, N, T), 0, P)
    X = X.at[..., 0].set(pa_idx.astype(jnp.float32))
    t_keys = (k_t0, k_t1, k_t2, k_t3, k_t4)
    for i, vocab in enumerate(TIME_VOCABS):
        ti = jax.random.randint(t_keys[i], (B, N, T), 0, vocab)
        X = X.at[..., i + 4].set(ti.astype(jnp.float32))
    pa_onehot = jax.random.uniform(k_paoh, (B, N, T, P), dtype=jnp.float32) * 0.1
    return X, pa_onehot


if __name__ == "__main__":
    key = jax.random.PRNGKey(0)
    k_emb, k_in1, k_in2 = jax.random.split(key, 3)
    emb_tables = init_feature_emb_params(k_emb)

    ok = True
    # Case 1: small standard shapes. B=2, N=4, T_in=16, F=9, P=8 (M=128).
    # Case 2: ragged row count (M=21) to exercise the partial-last-block path.
    for k_in, (B, N, T, F, P) in ((k_in1, (2, 4, 16, 9, 8)),
                                  (k_in2, (1, 3, 7, 9, 8))):
        X, pa_onehot = _make_inputs(k_in, B, N, T, F, P)
        X_cxt, X_pa, X_time = feature_emb_forward(X, pa_onehot, emb_tables)
        jax.block_until_ready((X_cxt, X_pa, X_time))

        r_cxt, r_pa, r_time = _reference_forward(X, pa_onehot, emb_tables)
        ok &= X_cxt.shape == (B, N, T, 2)
        ok &= X_pa.shape == (B, N, T, P)
        ok &= X_time.shape == (B, N, T, TIME_WIDTH)
        ok &= bool(jnp.allclose(X_cxt, r_cxt, atol=1e-6))
        ok &= bool(jnp.allclose(X_pa, r_pa, atol=1e-6))
        ok &= bool(jnp.allclose(X_time, r_time, atol=1e-5))

    assert ok
    print("KERNEL_OK")
</pallas_src>

<mosaic_0001>
module attributes {stable_mosaic.version = 11 : i64} {
  func.func @_feature_emb_kernel(%arg0: i32, %arg1: memref<64x9xf32, #tpu.memory_space<vmem>>, %arg2: memref<64x8xf32, #tpu.memory_space<vmem>>, %arg3: memref<78x20xf32, #tpu.memory_space<vmem>>, %arg4: memref<64x2xf32, #tpu.memory_space<vmem>>, %arg5: memref<64x8xf32, #tpu.memory_space<vmem>>, %arg6: memref<64x20xf32, #tpu.memory_space<vmem>>) attributes {dimension_semantics = [#tpu.dimension_semantics<parallel>], iteration_bounds = array<i64: 2>, scalar_prefetch = 0 : i64, scratch_operands = 0 : i64, tpu.core_type = #tpu.core_type<tc>, window_params = [{transform_indices = @transform_0, window_bounds = array<i64: 64, 9>}, {transform_indices = @transform_1, window_bounds = array<i64: 64, 8>}, {pipeline_mode = #tpu.pipeline_mode<synchronous>, transform_indices = @transform_2, window_bounds = array<i64: 78, 20>}, {transform_indices = @transform_3, window_bounds = array<i64: 64, 2>}, {transform_indices = @transform_4, window_bounds = array<i64: 64, 8>}, {transform_indices = @transform_5, window_bounds = array<i64: 64, 20>}]} {
    %c0 = arith.constant 0 : index
    %c0_0 = arith.constant 0 : index
    %0 = vector.load %arg1[%c0, %c0_0] : memref<64x9xf32, #tpu.memory_space<vmem>>, vector<64x9xf32>
    %1 = vector.extract_strided_slice %0 {offsets = [0, 2], sizes = [64, 2], strides = [1, 1]} : vector<64x9xf32> to vector<64x2xf32>
    %c0_1 = arith.constant 0 : index
    %c0_2 = arith.constant 0 : index
    %2 = vector.load %arg4[%c0_1, %c0_2] : memref<64x2xf32, #tpu.memory_space<vmem>>, vector<64x2xf32>
    tpu.vector_store %arg4[%c0_1, %c0_2], %1 {strides = array<i32>} : memref<64x2xf32, #tpu.memory_space<vmem>>, vector<64x2xf32>,
    %3 = vector.extract_strided_slice %0 {offsets = [0, 0], sizes = [64, 1], strides = [1, 1]} : vector<64x9xf32> to vector<64x1xf32>
    %4 = arith.fptosi %3 : vector<64x1xf32> to vector<64x1xi32>
    %5 = tpu.iota {dimensions = array<i32: 1>} : vector<64x8xi32>
    %6 = vector.broadcast %4 : vector<64x1xi32> to vector<64x8xi32>
    %7 = arith.cmpi eq, %5, %6 : vector<64x8xi32>
    %c0_3 = arith.constant 0 : index
    %c0_4 = arith.constant 0 : index
    %8 = vector.load %arg2[%c0_3, %c0_4] : memref<64x8xf32, #tpu.memory_space<vmem>>, vector<64x8xf32>
    %cst = arith.constant 1.000000e+00 : f32
    %9 = vector.broadcast %cst : f32 to vector<64x8xf32>
    %10 = arith.select %7, %9, %8 : vector<64x8xi1>, vector<64x8xf32>
    %c0_5 = arith.constant 0 : index
    %c0_6 = arith.constant 0 : index
    %11 = vector.load %arg5[%c0_5, %c0_6] : memref<64x8xf32, #tpu.memory_space<vmem>>, vector<64x8xf32>
    tpu.vector_store %arg5[%c0_5, %c0_6], %10 {strides = array<i32>} : memref<64x8xf32, #tpu.memory_space<vmem>>, vector<64x8xf32>,
    %12 = tpu.iota {dimensions = array<i32: 1>} : vector<64x78xi32>
    %13 = vector.extract_strided_slice %0 {offsets = [0, 4], sizes = [64, 1], strides = [1, 1]} : vector<64x9xf32> to vector<64x1xf32>
    %14 = arith.fptosi %13 : vector<64x1xf32> to vector<64x1xi32>
    %c0_i32 = arith.constant 0 : i32
    %15 = vector.broadcast %c0_i32 : i32 to vector<64x1xi32>
    %16 = arith.addi %14, %15 : vector<64x1xi32>
    %17 = vector.broadcast %16 : vector<64x1xi32> to vector<64x78xi32>
    %18 = arith.cmpi eq, %12, %17 : vector<64x78xi32>
    %19 = vector.extract_strided_slice %0 {offsets = [0, 5], sizes = [64, 1], strides = [1, 1]} : vector<64x9xf32> to vector<64x1xf32>
    %20 = arith.fptosi %19 : vector<64x1xf32> to vector<64x1xi32>
    %c12_i32 = arith.constant 12 : i32
    %21 = vector.broadcast %c12_i32 : i32 to vector<64x1xi32>
    %22 = arith.addi %20, %21 : vector<64x1xi32>
    %23 = vector.broadcast %22 : vector<64x1xi32> to vector<64x78xi32>
    %24 = arith.cmpi eq, %12, %23 : vector<64x78xi32>
    %25 = arith.ori %18, %24 : vector<64x78xi1>
    %26 = vector.extract_strided_slice %0 {offsets = [0, 6], sizes = [64, 1], strides = [1, 1]} : vector<64x9xf32> to vector<64x1xf32>
    %27 = arith.fptosi %26 : vector<64x1xf32> to vector<64x1xi32>
    %c43_i32 = arith.constant 43 : i32
    %28 = vector.broadcast %c43_i32 : i32 to vector<64x1xi32>
    %29 = arith.addi %27, %28 : vector<64x1xi32>
    %30 = vector.broadcast %29 : vector<64x1xi32> to vector<64x78xi32>
    %31 = arith.cmpi eq, %12, %30 : vector<64x78xi32>
    %32 = arith.ori %25, %31 : vector<64x78xi1>
    %33 = vector.extract_strided_slice %0 {offsets = [0, 7], sizes = [64, 1], strides = [1, 1]} : vector<64x9xf32> to vector<64x1xf32>
    %34 = arith.fptosi %33 : vector<64x1xf32> to vector<64x1xi32>
    %c67_i32 = arith.constant 67 : i32
    %35 = vector.broadcast %c67_i32 : i32 to vector<64x1xi32>
    %36 = arith.addi %34, %35 : vector<64x1xi32>
    %37 = vector.broadcast %36 : vector<64x1xi32> to vector<64x78xi32>
    %38 = arith.cmpi eq, %12, %37 : vector<64x78xi32>
    %39 = arith.ori %32, %38 : vector<64x78xi1>
    %40 = vector.extract_strided_slice %0 {offsets = [0, 8], sizes = [64, 1], strides = [1, 1]} : vector<64x9xf32> to vector<64x1xf32>
    %41 = arith.fptosi %40 : vector<64x1xf32> to vector<64x1xi32>
    %c71_i32 = arith.constant 71 : i32
    %42 = vector.broadcast %c71_i32 : i32 to vector<64x1xi32>
    %43 = arith.addi %41, %42 : vector<64x1xi32>
    %44 = vector.broadcast %43 : vector<64x1xi32> to vector<64x78xi32>
    %45 = arith.cmpi eq, %12, %44 : vector<64x78xi32>
    %46 = arith.ori %39, %45 : vector<64x78xi1>
    %47 = arith.extui %46 : vector<64x78xi1> to vector<64x78xi32>
    %48 = arith.sitofp %47 : vector<64x78xi32> to vector<64x78xf32>
    %c0_7 = arith.constant 0 : index
    %c0_8 = arith.constant 0 : index
    %49 = vector.load %arg3[%c0_7, %c0_8] : memref<78x20xf32, #tpu.memory_space<vmem>>, vector<78x20xf32>
    %cst_9 = arith.constant dense<0.000000e+00> : vector<64x20xf32>
    %50 = tpu.matmul %48, %49, %cst_9 {dimension_numbers = #tpu.dot_dimension_numbers<[1], [0], [0], [1], [0, 0, 1, 1], [], []>} : vector<64x78xf32>, vector<78x20xf32>, vector<64x20xf32> -> vector<64x20xf32>
    %c0_10 = arith.constant 0 : index
    %c0_11 = arith.constant 0 : index
    %51 = vector.load %arg6[%c0_10, %c0_11] : memref<64x20xf32, #tpu.memory_space<vmem>>, vector<64x20xf32>
    tpu.vector_store %arg6[%c0_10, %c0_11], %50 {strides = array<i32>} : memref<64x20xf32, #tpu.memory_space<vmem>>, vector<64x20xf32>,
    return
  }
  func.func @transform_0(%arg0: i32) -> (i32, i32) {
    %c0_i32 = arith.constant 0 : i32
    %c0_i32_0 = arith.constant 0 : i32
    return %arg0, %c0_i32 : i32, i32
  }
  func.func @transform_1(%arg0: i32) -> (i32, i32) {
    %c0_i32 = arith.constant 0 : i32
    %c0_i32_0 = arith.constant 0 : i32
    return %arg0, %c0_i32 : i32, i32
  }
  func.func @transform_2(%arg0: i32) -> (i32, i32) {
    %c0_i32 = arith.constant 0 : i32
    %c0_i32_0 = arith.constant 0 : i32
    %c0_i32_1 = arith.constant 0 : i32
    return %c0_i32, %c0_i32_0 : i32, i32
  }
  func.func @transform_3(%arg0: i32) -> (i32, i32) {
    %c0_i32 = arith.constant 0 : i32
    %c0_i32_0 = arith.constant 0 : i32
    return %arg0, %c0_i32 : i32, i32
  }
  func.func @transform_4(%arg0: i32) -> (i32, i32) {
    %c0_i32 = arith.constant 0 : i32
    %c0_i32_0 = arith.constant 0 : i32
    return %arg0, %c0_i32 : i32, i32
  }
  func.func @transform_5(%arg0: i32) -> (i32, i32) {
    %c0_i32 = arith.constant 0 : i32
    %c0_i32_0 = arith.constant 0 : i32
    return %arg0, %c0_i32 : i32, i32
  }
}

</mosaic_0001>

<llo_original>
// kernel: feature_emb_forward.1
$region0: #{feature_emb_forward.1}
  #allocation0 [shape = 'u32[]', space=smem, size = 0x4, offset = 0x4, fixed_abs, tag = 'smem constant byte address 0x4 - core index']
  #allocation1 [shape = 'u32[144,128]{1,0:T(1,128)}', space=vmem, size = 0x12000, scoped, tag = 'internal scratch']
  %s0 = inlined_call_operand.vmem [shape: f32[128,9], index: 0, kind: input, shape index: {}]
  %s1 = inlined_call_operand.vmem [shape: f32[128,8], index: 1, kind: input, shape index: {}]
  %s2 = inlined_call_operand.vmem [shape: f32[78,20], index: 2, kind: input, shape index: {}]
  %s3 = inlined_call_operand.vmem [shape: f32[128,2], index: 3, kind: output, shape index: {0}]
  %s4 = inlined_call_operand.vmem [shape: f32[128,8], index: 4, kind: output, shape index: {1}]
  %s5 = inlined_call_operand.hbm [shape: f32[128,20], index: 5, kind: output, shape index: {2}]
  %6 = xla_tuple %s3, %s4, %s5
  %s7 = sld [smem:[#allocation0]]
  $region61: #{feature_emb_forward.1} parent=0
    _
  %s9 = ssub.s32 1, %s7
  %s10 = scalar_select 0, %s9, %s7
  $region1: #{feature_emb_forward.1} parent=0
    #allocation2 [shape = 'u8[65536]{0}', space=vmem, size = 0x10000, scoped, tag = 'output window, operand 2']
    #allocation3 [shape = 's32[2]{0}', space=sflag, size = 0x8, scoped, tag = 'scoped memory for feature_emb_forward.1']
    %11 = vsyncpa [#allocation3], 0
    %s12 = scalar_lea.sflag [#allocation3], 1
    %13 = vsyncpa %s12, 0
    loop: start=0, step=1, limit=4
    $region2: #{feature_emb_forward.1} parent=1 // loop_pre_header
      _
    $region3: #{feature_emb_forward.1} parent=1 // loop_header
      %s15 = sphi 0, %s19
      %p16 = scmp.ge.s32.totalorder %s15, 4
      %s25 = sphi 0, %s27
      %s28 = sphi 0, %s25
      %s29 = sphi 0, %s28
      %s45 = sphi 0, %s29
      %s51 = sphi 0, %s53
      %s54 = sphi 0, %s51
      %s55 = sphi 0, %s54
      %s71 = sphi 0, %s55
      %s75 = sphi 0, %s75
      %s77 = sphi 0, %s75
      %s78 = sphi 0, %s77
      %s92 = sphi 0, %s78
      %s98 = sphi 0, %s100
      %s101 = sphi 0, %s98
      %s102 = sphi 0, %s101
      %s118 = sphi 0, %s102
      %s124 = sphi 0, %s126
      %s127 = sphi 0, %s124
      %s128 = sphi 0, %s127
      %s144 = sphi 0, %s128
      %s150 = sphi 0, %s152
      %s153 = sphi 0, %s150
      %s154 = sphi 0, %s153
      %s170 = sphi 0, %s154
    $region4: #{feature_emb_forward.1} parent=1 // loop_header_branch
      %18 = sbr.rel (%p16) target = $region8
    $region5: #{feature_emb_forward.1} parent=1 // loop_body
      %s20 = ssub.s32 %s15, 1
      %s21 = ssub.s32 %s15, 2
      %s22 = sadd.s32 %s15, 1
      %s23 = ssub.s32 %s15, %s22
      %p24 = scmp.eq.s32.totalorder %s23, 0
      %s26 = sadd.s32 %s25, 1
      %s27 = scalar_select %p24, %s25, %s26
      %p30 = pneg %p24
      %p31 = scmp.eq.s32.totalorder %s15, 1
      %p32 = por %p30, %p31
      %p33 = scmp.ne.s32.totalorder %s25, %s28
      %p34 = scmp.eq.s32.totalorder %s15, 0
      %p35 = por %p33, %p34
      %p36 = scmp.ne.s32.totalorder %s25, %s28
      %p37 = scmp.eq.s32.totalorder %s20, 1
      %p38 = por %p36, %p37
      %p39 = scmp.ne.s32.totalorder %s28, %s29
      %p40 = scmp.eq.s32.totalorder %s20, 0
      %p41 = por %p39, %p40
      %p42 = scmp.ne.s32.totalorder %s28, %s29
      %p43 = scmp.eq.s32.totalorder %s21, 1
      %p44 = por %p42, %p43
      %p46 = scmp.ne.s32.totalorder %s29, %s45
      %p47 = scmp.eq.s32.totalorder %s21, 0
      %p48 = por %p46, %p47
      %s49 = ssub.s32 %s15, %s22
      %p50 = scmp.eq.s32.totalorder %s49, 0
      %s52 = sadd.s32 %s51, 1
      %s53 = scalar_select %p50, %s51, %s52
      %p56 = pneg %p50
      %p57 = scmp.eq.s32.totalorder %s15, 1
      %p58 = por %p56, %p57
      %p59 = scmp.ne.s32.totalorder %s51, %s54
      %p60 = scmp.eq.s32.totalorder %s15, 0
      %p61 = por %p59, %p60
      %p62 = scmp.ne.s32.totalorder %s51, %s54
      %p63 = scmp.eq.s32.totalorder %s20, 1
      %p64 = por %p62, %p63
      %p65 = scmp.ne.s32.totalorder %s54, %s55
      %p66 = scmp.eq.s32.totalorder %s20, 0
      %p67 = por %p65, %p66
      %p68 = scmp.ne.s32.totalorder %s54, %s55
      %p69 = scmp.eq.s32.totalorder %s21, 1
      %p70 = por %p68, %p69
      %p72 = scmp.ne.s32.totalorder %s55, %s71
      %p73 = scmp.eq.s32.totalorder %s21, 0
      %p74 = por %p72, %p73
      %s76 = sadd.s32 %s75, 1
      %p79 = scmp.eq.s32.totalorder %s15, 1
      %p80 = scmp.ne.s32.totalorder %s75, %s77
      %p81 = scmp.eq.s32.totalorder %s15, 0
      %p82 = por %p80, %p81
      %p83 = scmp.ne.s32.totalorder %s75, %s77
      %p84 = scmp.eq.s32.totalorder %s20, 1
      %p85 = por %p83, %p84
      %p86 = scmp.ne.s32.totalorder %s77, %s78
      %p87 = scmp.eq.s32.totalorder %s20, 0
      %p88 = por %p86, %p87
      %p89 = scmp.ne.s32.totalorder %s77, %s78
      %p90 = scmp.eq.s32.totalorder %s21, 1
      %p91 = por %p89, %p90
      %p93 = scmp.ne.s32.totalorder %s78, %s92
      %p94 = scmp.eq.s32.totalorder %s21, 0
      %p95 = por %p93, %p94
      %s96 = ssub.s32 %s15, %s22
      %p97 = scmp.eq.s32.totalorder %s96, 0
      %s99 = sadd.s32 %s98, 1
      %s100 = scalar_select %p97, %s98, %s99
      %p103 = pneg %p97
      %p104 = scmp.eq.s32.totalorder %s15, 1
      %p105 = por %p103, %p104
      %p106 = scmp.ne.s32.totalorder %s98, %s101
      %p107 = scmp.eq.s32.totalorder %s15, 0
      %p108 = por %p106, %p107
      %p109 = scmp.ne.s32.totalorder %s98, %s101
      %p110 = scmp.eq.s32.totalorder %s20, 1
      %p111 = por %p109, %p110
      %p112 = scmp.ne.s32.totalorder %s101, %s102
      %p113 = scmp.eq.s32.totalorder %s20, 0
      %p114 = por %p112, %p113
      %p115 = scmp.ne.s32.totalorder %s101, %s102
      %p116 = scmp.eq.s32.totalorder %s21, 1
      %p117 = por %p115, %p116
      %p119 = scmp.ne.s32.totalorder %s102, %s118
      %p120 = scmp.eq.s32.totalorder %s21, 0
      %p121 = por %p119, %p120
      %s122 = ssub.s32 %s15, %s22
      %p123 = scmp.eq.s32.totalorder %s122, 0
      %s125 = sadd.s32 %s124, 1
      %s126 = scalar_select %p123, %s124, %s125
      %p129 = pneg %p123
      %p130 = scmp.eq.s32.totalorder %s15, 1
      %p131 = por %p129, %p130
      %p132 = scmp.ne.s32.totalorder %s124, %s127
      %p133 = scmp.eq.s32.totalorder %s15, 0
      %p134 = por %p132, %p133
      %p135 = scmp.ne.s32.totalorder %s124, %s127
      %p136 = scmp.eq.s32.totalorder %s20, 1
      %p137 = por %p135, %p136
      %p138 = scmp.ne.s32.totalorder %s127, %s128
      %p139 = scmp.eq.s32.totalorder %s20, 0
      %p140 = por %p138, %p139
      %p141 = scmp.ne.s32.totalorder %s127, %s128
      %p142 = scmp.eq.s32.totalorder %s21, 1
      %p143 = por %p141, %p142
      %p145 = scmp.ne.s32.totalorder %s128, %s144
      %p146 = scmp.eq.s32.totalorder %s21, 0
      %p147 = por %p145, %p146
      %s148 = ssub.s32 %s15, %s22
      %p149 = scmp.eq.s32.totalorder %s148, 0
      %s151 = sadd.s32 %s150, 1
      %s152 = scalar_select %p149, %s150, %s151
      %p155 = pneg %p149
      %p156 = scmp.eq.s32.totalorder %s15, 1
      %p157 = por %p155, %p156
      %p158 = scmp.ne.s32.totalorder %s150, %s153
      %p159 = scmp.eq.s32.totalorder %s15, 0
      %p160 = por %p158, %p159
      %p161 = scmp.ne.s32.totalorder %s150, %s153
      %p162 = scmp.eq.s32.totalorder %s20, 1
      %p163 = por %p161, %p162
      %p164 = scmp.ne.s32.totalorder %s153, %s154
      %p165 = scmp.eq.s32.totalorder %s20, 0
      %p166 = por %p164, %p165
      %p167 = scmp.ne.s32.totalorder %s153, %s154
      %p168 = scmp.eq.s32.totalorder %s21, 1
      %p169 = por %p167, %p168
      %p171 = scmp.ne.s32.totalorder %s154, %s170
      %p172 = scmp.eq.s32.totalorder %s21, 0
      %p173 = por %p171, %p172
      %p174 = scmp.le.s32.totalorder 1, %s15
      %p175 = scmp.lt.s32.totalorder %s15, 3
      %p176 = pnand %p174, %p175
      %p177 = pneg %p176
      // Predicated region
      $region9: #{feature_emb_forward.1} parent=5 // pred_check
        _
      $region10: #{feature_emb_forward.1} parent=5 // pred_check_branch
        %179 = sbr.rel (%p176) target = $region12
      $region11: #{feature_emb_forward.1} parent=5 // pred_region
        %s180 = ssub.s32 %s15, 1
        // Predicated region
        $region13: #{feature_emb_forward.1} parent=11 // pred_check
          %p181 = pneg %p88
        $region14: #{feature_emb_forward.1} parent=11 // pred_check_branch
          %183 = sbr.rel (%p181) target = $region16
        $region15: #{feature_emb_forward.1} parent=11 // pred_region
          _
        $region16: #{feature_emb_forward.1} parent=11 // pred_fallthru
          _
      $region12: #{feature_emb_forward.1} parent=5 // pred_fallthru
        _
      %p184 = scmp.lt.s32.totalorder %s15, 2
      // Predicated region
      $region17: #{feature_emb_forward.1} parent=5 // pred_check
        %p185 = pneg %p184
      $region18: #{feature_emb_forward.1} parent=5 // pred_check_branch
        %187 = sbr.rel (%p185) target = $region20
      $region19: #{feature_emb_forward.1} parent=5 // pred_region
        // Predicated region
        $region21: #{feature_emb_forward.1} parent=19 // pred_check
          %p188 = pneg %p35
        $region22: #{feature_emb_forward.1} parent=19 // pred_check_branch
          %190 = sbr.rel (%p188) target = $region24
        $region23: #{feature_emb_forward.1} parent=19 // pred_region
          %s191 = smul.u32 8, %s15
          %p192 = scmp.lt.s32.totalorder %s191, 15
          %s193 = scalar_select %p192, %s191, 15
          %s194 = smul.addr %s193, 8
          %s195 = scalar_lea.vmem %s0, %s194
          %s196 = smul.u32 8, %s15
        $region24: #{feature_emb_forward.1} parent=19 // pred_fallthru
          _
        // Predicated region
        $region25: #{feature_emb_forward.1} parent=19 // pred_check
          %p197 = pneg %p61
        $region26: #{feature_emb_forward.1} parent=19 // pred_check_branch
          %199 = sbr.rel (%p197) target = $region28
        $region27: #{feature_emb_forward.1} parent=19 // pred_region
          %s200 = smul.u32 8, %s15
          %p201 = scmp.lt.s32.totalorder %s200, 15
          %s202 = scalar_select %p201, %s200, 15
          %s203 = smul.addr %s202, 8
          %s204 = scalar_lea.vmem %s1, %s203
          %s205 = smul.u32 8, %s15
        $region28: #{feature_emb_forward.1} parent=19 // pred_fallthru
          _
      $region20: #{feature_emb_forward.1} parent=5 // pred_fallthru
        _
      %p206 = scmp.le.s32.totalorder 1, %s15
      %p207 = scmp.lt.s32.totalorder %s15, 3
      %p208 = pnand %p206, %p207
      %p209 = pneg %p208
      // Predicated region
      $region29: #{feature_emb_forward.1} parent=5 // pred_check
        _
      $region30: #{feature_emb_forward.1} parent=5 // pred_check_branch
        %211 = sbr.rel (%p208) target = $region32
      $region31: #{feature_emb_forward.1} parent=5 // pred_region
        %s212 = ssub.s32 %s15, 1
        %s213 = smul.u32 8, %s20
        %p214 = scmp.lt.s32.totalorder %s213, 15
        %s215 = scalar_select %p214, %s213, 15
        %s216 = smul.addr %s215, 8
        %s217 = scalar_lea.vmem %s0, %s216
        %p218 = pneg %p41
        %p219 = pneg %p38
        %s220 = smul.u32 8, %s20
        %p221 = scmp.lt.s32.totalorder %s220, 15
        %s222 = scalar_select %p221, %s220, 15
        %s223 = smul.addr %s222, 8
        %s224 = scalar_lea.vmem %s1, %s223
        %p225 = pneg %p67
        %p226 = pneg %p64
        %p227 = pneg %p88
        %p228 = pneg %p85
        %p229 = pneg %p114
        %p230 = pneg %p111
        %s231 = smul.u32 8, %s20
        %p232 = scmp.lt.s32.totalorder %s231, 15
        %s233 = scalar_select %p232, %s231, 15
        %s234 = smul.addr %s233, 8
        %s235 = scalar_lea.vmem %s3, %s234
        %p236 = pneg %p140
        %p237 = pneg %p137
        %s238 = smul.u32 8, %s20
        %p239 = scmp.lt.s32.totalorder %s238, 15
        %s240 = scalar_select %p239, %s238, 15
        %s241 = smul.addr %s240, 8
        %s242 = scalar_lea.vmem %s4, %s241
        %p243 = pneg %p166
        %p244 = pneg %p163
        %s245 = sand.u32 %s153, 1
        %s246 = scalar_lea.sflag [#allocation3], %s245
        %s247 = sand.u32 %s153, 1
        %s248 = smul.addr %s247, 64
        %s249 = scalar_lea.vmem [#allocation2], %s248
        %s250 = smul.u32 8, %s20
        %p251 = scmp.lt.s32.totalorder %s250, 15
        %s252 = scalar_select %p251, %s250, 15
        %s253 = smul.addr %s252, 8
        %s254 = scalar_lea.vmem %s0, %s253
        %s255 = smul.u32 8, %s20
        %s256 = smul.u32 8, %s20
        %p257 = scmp.lt.s32.totalorder %s256, 15
        %s258 = scalar_select %p257, %s256, 15
        %s259 = smul.addr %s258, 8
        %s260 = scalar_lea.vmem %s1, %s259
        %s261 = smul.u32 8, %s20
        %s262 = smul.u32 8, %s20
        %p263 = scmp.lt.s32.totalorder %s262, 15
        %s264 = scalar_select %p263, %s262, 15
        %s265 = smul.addr %s264, 8
        %s266 = scalar_lea.vmem %s3, %s265
        %s267 = smul.u32 8, %s20
        %s268 = smul.u32 8, %s20
        %p269 = scmp.lt.s32.totalorder %s268, 15
        %s270 = scalar_select %p269, %s268, 15
        %s271 = smul.addr %s270, 8
        %s272 = scalar_lea.vmem %s4, %s271
        %s273 = smul.u32 8, %s20
        %s274 = smul.u32 8, %s20
        %v275 = vld [vmem:[%s254] sm:$0xff]
        %v276 = vld [vmem:[%s254 + $0x8] sm:$0xff]
        %v277 = vld [vmem:[%s254 + $0x10] sm:$0xff]
        %v278 = vld [vmem:[%s254 + $0x18] sm:$0xff]
        %v279 = vld [vmem:[%s254 + $0x20] sm:$0xff]
        %v280 = vld [vmem:[%s254 + $0x28] sm:$0xff]
        %v281 = vld [vmem:[%s254 + $0x30] sm:$0xff]
        %v282 = vld [vmem:[%s254 + $0x38] sm:$0xff]
        %291 = vrot.lane.b32.xlu0 %v275, 126
        %v292 = vpop.permute.xlu0 %291
        %293 = vrot.lane.b32.xlu0 %v276, 126
        %v294 = vpop.permute.xlu0 %293
        %295 = vrot.lane.b32.xlu0 %v277, 126
        %v296 = vpop.permute.xlu0 %295
        %297 = vrot.lane.b32.xlu0 %v278, 126
        %v298 = vpop.permute.xlu0 %297
        %299 = vrot.lane.b32.xlu0 %v279, 126
        %v300 = vpop.permute.xlu0 %299
        %301 = vrot.lane.b32.xlu0 %v280, 126
        %v302 = vpop.permute.xlu0 %301
        %303 = vrot.lane.b32.xlu0 %v281, 126
        %v304 = vpop.permute.xlu0 %303
        %305 = vrot.lane.b32.xlu0 %v282, 126
        %v306 = vpop.permute.xlu0 %305
        %vm315 = vcmask 15360
        %316 = vst.msk [vmem:[%s266] sm:$0xff] %vm315, %v292
        %317 = vst.msk [vmem:[%s266 + $0x8] sm:$0xff] %vm315, %v294
        %318 = vst.msk [vmem:[%s266 + $0x10] sm:$0xff] %vm315, %v296
        %319 = vst.msk [vmem:[%s266 + $0x18] sm:$0xff] %vm315, %v298
        %320 = vst.msk [vmem:[%s266 + $0x20] sm:$0xff] %vm315, %v300
        %321 = vst.msk [vmem:[%s266 + $0x28] sm:$0xff] %vm315, %v302
        %322 = vst.msk [vmem:[%s266 + $0x30] sm:$0xff] %vm315, %v304
        %323 = vst.msk [vmem:[%s266 + $0x38] sm:$0xff] %vm315, %v306
        %v324 = vcvt.f32.s32.to.zero.pseudo %v275
        %v325 = vcvt.f32.s32.to.zero.pseudo %v276
        %v326 = vcvt.f32.s32.to.zero.pseudo %v277
        %v327 = vcvt.f32.s32.to.zero.pseudo %v278
        %v328 = vcvt.f32.s32.to.zero.pseudo %v279
        %v329 = vcvt.f32.s32.to.zero.pseudo %v280
        %v330 = vcvt.f32.s32.to.zero.pseudo %v281
        %v331 = vcvt.f32.s32.to.zero.pseudo %v282
        %v332 = vlaneseq
        %v333 = vand.u32 %v332, 127
        %334 = vset.pattern.permute.xlu0 0
        %335 = vperm.xlu0 %334, %v324
        %v336 = vpop.permute.xlu0 %335
        %337 = vset.pattern.permute.xlu0 0
        %338 = vperm.xlu0 %337, %v325
        %v339 = vpop.permute.xlu0 %338
        %340 = vset.pattern.permute.xlu0 0
        %341 = vperm.xlu0 %340, %v326
        %v342 = vpop.permute.xlu0 %341
        %343 = vset.pattern.permute.xlu0 0
        %344 = vperm.xlu0 %343, %v327
        %v345 = vpop.permute.xlu0 %344
        %346 = vset.pattern.permute.xlu0 0
        %347 = vperm.xlu0 %346, %v328
        %v348 = vpop.permute.xlu0 %347
        %349 = vset.pattern.permute.xlu0 0
        %350 = vperm.xlu0 %349, %v329
        %v351 = vpop.permute.xlu0 %350
        %352 = vset.pattern.permute.xlu0 0
        %353 = vperm.xlu0 %352, %v330
        %v354 = vpop.permute.xlu0 %353
        %355 = vset.pattern.permute.xlu0 0
        %356 = vperm.xlu0 %355, %v331
        %v357 = vpop.permute.xlu0 %356
        %vm358 = vcmp.eq.s32.totalorder %v333, %v336
        %vm359 = vcmp.eq.s32.totalorder %v333, %v339
        %vm360 = vcmp.eq.s32.totalorder %v333, %v342
        %vm361 = vcmp.eq.s32.totalorder %v333, %v345
        %vm362 = vcmp.eq.s32.totalorder %v333, %v348
        %vm363 = vcmp.eq.s32.totalorder %v333, %v351
        %vm364 = vcmp.eq.s32.totalorder %v333, %v354
        %vm365 = vcmp.eq.s32.totalorder %v333, %v357
        %v366 = vld [vmem:[%s260] sm:$0xff]
        %v367 = vld [vmem:[%s260 + $0x8] sm:$0xff]
        %v368 = vld [vmem:[%s260 + $0x10] sm:$0xff]
        %v369 = vld [vmem:[%s260 + $0x18] sm:$0xff]
        %v370 = vld [vmem:[%s260 + $0x20] sm:$0xff]
        %v371 = vld [vmem:[%s260 + $0x28] sm:$0xff]
        %v372 = vld [vmem:[%s260 + $0x30] sm:$0xff]
        %v373 = vld [vmem:[%s260 + $0x38] sm:$0xff]
        %v374 = vsel %vm358, 1.0, %v366
        %v375 = vsel %vm359, 1.0, %v367
        %v376 = vsel %vm360, 1.0, %v368
        %v377 = vsel %vm361, 1.0, %v369
        %v378 = vsel %vm362, 1.0, %v370
        %v379 = vsel %vm363, 1.0, %v371
        %v380 = vsel %vm364, 1.0, %v372
        %v381 = vsel %vm365, 1.0, %v373
        %vm382 = vcmask 64512
        %383 = vst.msk [vmem:[%s272] sm:$0xff] %vm382, %v374
        %384 = vst.msk [vmem:[%s272 + $0x8] sm:$0xff] %vm382, %v375
        %385 = vst.msk [vmem:[%s272 + $0x10] sm:$0xff] %vm382, %v376
        %386 = vst.msk [vmem:[%s272 + $0x18] sm:$0xff] %vm382, %v377
        %387 = vst.msk [vmem:[%s272 + $0x20] sm:$0xff] %vm382, %v378
        %388 = vst.msk [vmem:[%s272 + $0x28] sm:$0xff] %vm382, %v379
        %389 = vst.msk [vmem:[%s272 + $0x30] sm:$0xff] %vm382, %v380
        %390 = vst.msk [vmem:[%s272 + $0x38] sm:$0xff] %vm382, %v381
        %391 = vset.pattern.permute.xlu0 4
        %392 = vperm.xlu0 %391, %v324
        %v393 = vpop.permute.xlu0 %392
        %394 = vset.pattern.permute.xlu0 4
        %395 = vperm.xlu0 %394, %v325
        %v396 = vpop.permute.xlu0 %395
        %397 = vset.pattern.permute.xlu0 4
        %398 = vperm.xlu0 %397, %v326
        %v399 = vpop.permute.xlu0 %398
        %400 = vset.pattern.permute.xlu0 4
        %401 = vperm.xlu0 %400, %v327
        %v402 = vpop.permute.xlu0 %401
        %403 = vset.pattern.permute.xlu0 4
        %404 = vperm.xlu0 %403, %v328
        %v405 = vpop.permute.xlu0 %404
        %406 = vset.pattern.permute.xlu0 4
        %407 = vperm.xlu0 %406, %v329
        %v408 = vpop.permute.xlu0 %407
        %409 = vset.pattern.permute.xlu0 4
        %410 = vperm.xlu0 %409, %v330
        %v411 = vpop.permute.xlu0 %410
        %412 = vset.pattern.permute.xlu0 4
        %413 = vperm.xlu0 %412, %v331
        %v414 = vpop.permute.xlu0 %413
        %vm415 = vcmp.eq.s32.totalorder %v333, %v393
        %vm416 = vcmp.eq.s32.totalorder %v333, %v396
        %vm417 = vcmp.eq.s32.totalorder %v333, %v399
        %vm418 = vcmp.eq.s32.totalorder %v333, %v402
        %vm419 = vcmp.eq.s32.totalorder %v333, %v405
        %vm420 = vcmp.eq.s32.totalorder %v333, %v408
        %vm421 = vcmp.eq.s32.totalorder %v333, %v411
        %vm422 = vcmp.eq.s32.totalorder %v333, %v414
        %v423 = vadd.s32 %v324, 12
        %v424 = vadd.s32 %v325, 12
        %v425 = vadd.s32 %v326, 12
        %v426 = vadd.s32 %v327, 12
        %v427 = vadd.s32 %v328, 12
        %v428 = vadd.s32 %v329, 12
        %v429 = vadd.s32 %v330, 12
        %v430 = vadd.s32 %v331, 12
        %431 = vset.pattern.permute.xlu0 5
        %432 = vperm.xlu0 %431, %v423
        %v433 = vpop.permute.xlu0 %432
        %434 = vset.pattern.permute.xlu0 5
        %435 = vperm.xlu0 %434, %v424
        %v436 = vpop.permute.xlu0 %435
        %437 = vset.pattern.permute.xlu0 5
        %438 = vperm.xlu0 %437, %v425
        %v439 = vpop.permute.xlu0 %438
        %440 = vset.pattern.permute.xlu0 5
        %441 = vperm.xlu0 %440, %v426
        %v442 = vpop.permute.xlu0 %441
        %443 = vset.pattern.permute.xlu0 5
        %444 = vperm.xlu0 %443, %v427
        %v445 = vpop.permute.xlu0 %444
        %446 = vset.pattern.permute.xlu0 5
        %447 = vperm.xlu0 %446, %v428
        %v448 = vpop.permute.xlu0 %447
        %449 = vset.pattern.permute.xlu0 5
        %450 = vperm.xlu0 %449, %v429
        %v451 = vpop.permute.xlu0 %450
        %452 = vset.pattern.permute.xlu0 5
        %453 = vperm.xlu0 %452, %v430
        %v454 = vpop.permute.xlu0 %453
        %vm455 = vcmp.eq.s32.totalorder %v333, %v433
        %vm456 = vcmp.eq.s32.totalorder %v333, %v436
        %vm457 = vcmp.eq.s32.totalorder %v333, %v439
        %vm458 = vcmp.eq.s32.totalorder %v333, %v442
        %vm459 = vcmp.eq.s32.totalorder %v333, %v445
        %vm460 = vcmp.eq.s32.totalorder %v333, %v448
        %vm461 = vcmp.eq.s32.totalorder %v333, %v451
        %vm462 = vcmp.eq.s32.totalorder %v333, %v454
        %vm463 = vmor %vm415, %vm455
        %vm464 = vmor %vm416, %vm456
        %vm465 = vmor %vm417, %vm457
        %vm466 = vmor %vm418, %vm458
        %vm467 = vmor %vm419, %vm459
        %vm468 = vmor %vm420, %vm460
        %vm469 = vmor %vm421, %vm461
        %vm470 = vmor %vm422, %vm462
        %v471 = vadd.s32 %v324, 43
        %v472 = vadd.s32 %v325, 43
        %v473 = vadd.s32 %v326, 43
        %v474 = vadd.s32 %v327, 43
        %v475 = vadd.s32 %v328, 43
        %v476 = vadd.s32 %v329, 43
        %v477 = vadd.s32 %v330, 43
        %v478 = vadd.s32 %v331, 43
        %479 = vset.pattern.permute.xlu0 6
        %480 = vperm.xlu0 %479, %v471
        %v481 = vpop.permute.xlu0 %480
        %482 = vset.pattern.permute.xlu0 6
        %483 = vperm.xlu0 %482, %v472
        %v484 = vpop.permute.xlu0 %483
        %485 = vset.pattern.permute.xlu0 6
        %486 = vperm.xlu0 %485, %v473
        %v487 = vpop.permute.xlu0 %486
        %488 = vset.pattern.permute.xlu0 6
        %489 = vperm.xlu0 %488, %v474
        %v490 = vpop.permute.xlu0 %489
        %491 = vset.pattern.permute.xlu0 6
        %492 = vperm.xlu0 %491, %v475
        %v493 = vpop.permute.xlu0 %492
        %494 = vset.pattern.permute.xlu0 6
        %495 = vperm.xlu0 %494, %v476
        %v496 = vpop.permute.xlu0 %495
        %497 = vset.pattern.permute.xlu0 6
        %498 = vperm.xlu0 %497, %v477
        %v499 = vpop.permute.xlu0 %498
        %500 = vset.pattern.permute.xlu0 6
        %501 = vperm.xlu0 %500, %v478
        %v502 = vpop.permute.xlu0 %501
        %vm503 = vcmp.eq.s32.totalorder %v333, %v481
        %vm504 = vcmp.eq.s32.totalorder %v333, %v484
        %vm505 = vcmp.eq.s32.totalorder %v333, %v487
        %vm506 = vcmp.eq.s32.totalorder %v333, %v490
        %vm507 = vcmp.eq.s32.totalorder %v333, %v493
        %vm508 = vcmp.eq.s32.totalorder %v333, %v496
        %vm509 = vcmp.eq.s32.totalorder %v333, %v499
        %vm510 = vcmp.eq.s32.totalorder %v333, %v502
        %vm511 = vmor %vm463, %vm503
        %vm512 = vmor %vm464, %vm504
        %vm513 = vmor %vm465, %vm505
        %vm514 = vmor %vm466, %vm506
        %vm515 = vmor %vm467, %vm507
        %vm516 = vmor %vm468, %vm508
        %vm517 = vmor %vm469, %vm509
        %vm518 = vmor %vm470, %vm510
        %v519 = vadd.s32 %v324, 67
        %v520 = vadd.s32 %v325, 67
        %v521 = vadd.s32 %v326, 67
        %v522 = vadd.s32 %v327, 67
        %v523 = vadd.s32 %v328, 67
        %v524 = vadd.s32 %v329, 67
        %v525 = vadd.s32 %v330, 67
        %v526 = vadd.s32 %v331, 67
        %527 = vset.pattern.permute.xlu0 7
        %528 = vperm.xlu0 %527, %v519
        %v529 = vpop.permute.xlu0 %528
        %530 = vset.pattern.permute.xlu0 7
        %531 = vperm.xlu0 %530, %v520
        %v532 = vpop.permute.xlu0 %531
        %533 = vset.pattern.permute.xlu0 7
        %534 = vperm.xlu0 %533, %v521
        %v535 = vpop.permute.xlu0 %534
        %536 = vset.pattern.permute.xlu0 7
        %537 = vperm.xlu0 %536, %v522
        %v538 = vpop.permute.xlu0 %537
        %539 = vset.pattern.permute.xlu0 7
        %540 = vperm.xlu0 %539, %v523
        %v541 = vpop.permute.xlu0 %540
        %542 = vset.pattern.permute.xlu0 7
        %543 = vperm.xlu0 %542, %v524
        %v544 = vpop.permute.xlu0 %543
        %545 = vset.pattern.permute.xlu0 7
        %546 = vperm.xlu0 %545, %v525
        %v547 = vpop.permute.xlu0 %546
        %548 = vset.pattern.permute.xlu0 7
        %549 = vperm.xlu0 %548, %v526
        %v550 = vpop.permute.xlu0 %549
        %vm551 = vcmp.eq.s32.totalorder %v333, %v529
        %vm552 = vcmp.eq.s32.totalorder %v333, %v532
        %vm553 = vcmp.eq.s32.totalorder %v333, %v535
        %vm554 = vcmp.eq.s32.totalorder %v333, %v538
        %vm555 = vcmp.eq.s32.totalorder %v333, %v541
        %vm556 = vcmp.eq.s32.totalorder %v333, %v544
        %vm557 = vcmp.eq.s32.totalorder %v333, %v547
        %vm558 = vcmp.eq.s32.totalorder %v333, %v550
        %vm559 = vmor %vm511, %vm551
        %vm560 = vmor %vm512, %vm552
        %vm561 = vmor %vm513, %vm553
        %vm562 = vmor %vm514, %vm554
        %vm563 = vmor %vm515, %vm555
        %vm564 = vmor %vm516, %vm556
        %vm565 = vmor %vm517, %vm557
        %vm566 = vmor %vm518, %vm558
        %v567 = vadd.s32 %v324, 71
        %v568 = vadd.s32 %v325, 71
        %v569 = vadd.s32 %v326, 71
        %v570 = vadd.s32 %v327, 71
        %v571 = vadd.s32 %v328, 71
        %v572 = vadd.s32 %v329, 71
        %v573 = vadd.s32 %v330, 71
        %v574 = vadd.s32 %v331, 71
        %575 = vset.pattern.permute.xlu0 8
        %576 = vperm.xlu0 %575, %v567
        %v577 = vpop.permute.xlu0 %576
        %578 = vset.pattern.permute.xlu0 8
        %579 = vperm.xlu0 %578, %v568
        %v580 = vpop.permute.xlu0 %579
        %581 = vset.pattern.permute.xlu0 8
        %582 = vperm.xlu0 %581, %v569
        %v583 = vpop.permute.xlu0 %582
        %584 = vset.pattern.permute.xlu0 8
        %585 = vperm.xlu0 %584, %v570
        %v586 = vpop.permute.xlu0 %585
        %587 = vset.pattern.permute.xlu0 8
        %588 = vperm.xlu0 %587, %v571
        %v589 = vpop.permute.xlu0 %588
        %590 = vset.pattern.permute.xlu0 8
        %591 = vperm.xlu0 %590, %v572
        %v592 = vpop.permute.xlu0 %591
        %593 = vset.pattern.permute.xlu0 8
        %594 = vperm.xlu0 %593, %v573
        %v595 = vpop.permute.xlu0 %594
        %596 = vset.pattern.permute.xlu0 8
        %597 = vperm.xlu0 %596, %v574
        %v598 = vpop.permute.xlu0 %597
        %vm599 = vcmp.eq.s32.totalorder %v333, %v577
        %vm600 = vcmp.eq.s32.totalorder %v333, %v580
        %vm601 = vcmp.eq.s32.totalorder %v333, %v583
        %vm602 = vcmp.eq.s32.totalorder %v333, %v586
        %vm603 = vcmp.eq.s32.totalorder %v333, %v589
        %vm604 = vcmp.eq.s32.totalorder %v333, %v592
        %vm605 = vcmp.eq.s32.totalorder %v333, %v595
        %vm606 = vcmp.eq.s32.totalorder %v333, %v598
        %vm607 = vmor %vm559, %vm599
        %vm608 = vmor %vm560, %vm600
        %vm609 = vmor %vm561, %vm601
        %vm610 = vmor %vm562, %vm602
        %vm611 = vmor %vm563, %vm603
        %vm612 = vmor %vm564, %vm604
        %vm613 = vmor %vm565, %vm605
        %vm614 = vmor %vm566, %vm606
        %v615 = vsel %vm607, 1, 0
        %v616 = vsel %vm608, 1, 0
        %v617 = vsel %vm609, 1, 0
        %v618 = vsel %vm610, 1, 0
        %v619 = vsel %vm611, 1, 0
        %v620 = vsel %vm612, 1, 0
        %v621 = vsel %vm613, 1, 0
        %v622 = vsel %vm614, 1, 0
        %v623 = vcvt.s32.f32 %v615
        %v624 = vcvt.s32.f32 %v616
        %v625 = vcvt.s32.f32 %v617
        %v626 = vcvt.s32.f32 %v618
        %v627 = vcvt.s32.f32 %v619
        %v628 = vcvt.s32.f32 %v620
        %v629 = vcvt.s32.f32 %v621
        %v630 = vcvt.s32.f32 %v622
        %v631 = vld [vmem:[%s2] sm:$0xff]
        %v632 = vld [vmem:[%s2 + $0x8] sm:$0xff]
        %v633 = vld [vmem:[%s2 + $0x10] sm:$0xff]
        %v634 = vld [vmem:[%s2 + $0x18] sm:$0xff]
        %v635 = vld [vmem:[%s2 + $0x20] sm:$0xff]
        %v636 = vld [vmem:[%s2 + $0x28] sm:$0xff]
        %v637 = vld [vmem:[%s2 + $0x30] sm:$0xff]
        %v638 = vld [vmem:[%s2 + $0x38] sm:$0xff]
        %v639 = vld [vmem:[%s2 + $0x40] sm:$0xff]
        %v640 = vld [vmem:[%s2 + $0x48] sm:$0x3f]
        %vm641 = vcmask 637952
        %v643 = vsel %vm641, %v623, 0
        %v646 = vsel %vm641, %v624, 0
        %v649 = vsel %vm641, %v625, 0
        %v652 = vsel %vm641, %v626, 0
        %v655 = vsel %vm641, %v627, 0
        %v658 = vsel %vm641, %v628, 0
        %v661 = vsel %vm641, %v629, 0
        %v664 = vsel %vm641, %v630, 0
        %vm666 = vcmask 1045504
        %v668 = vsel %vm666, %v640, 0
        %670 = vmatprep.subr.mxu0 0.0
        %671 = vmatpush1.msra.mxu0 %v631
        %672 = vmatprep.subr.mxu0 0.0
        %673 = vmatpush1.msra.mxu0 %v632
        %674 = vmatprep.subr.mxu0 0.0
        %675 = vmatpush1.msra.mxu0 %v633
        %676 = vmatprep.subr.mxu0 0.0
        %677 = vmatpush1.msra.mxu0 %v634
        %678 = vmatprep.subr.mxu0 0.0
        %679 = vmatpush1.msra.mxu0 %v635
        %680 = vmatprep.subr.mxu0 0.0
        %681 = vmatpush1.msra.mxu0 %v636
        %682 = vmatprep.subr.mxu0 0.0
        %683 = vmatpush1.msra.mxu0 %v637
        %684 = vmatprep.subr.mxu0 0.0
        %685 = vmatpush1.msra.mxu0 %v638
        %686 = vmatprep.subr.mxu0 0.0
        %687 = vmatpush1.msra.mxu0 %v639
        %688 = vmatprep.subr.mxu0 0.0
        %689 = vmatpush1.msra.mxu0 %v668
        %690 = vmatprep.subr.mxu0 0.0
        %691 = vmatpush1.msra.mxu0 0.0
        %692 = vmatprep.subr.mxu0 0.0
        %693 = vmatpush1.msra.mxu0 0.0
        %694 = vmatprep.subr.mxu0 0.0
        %695 = vmatpush1.msra.mxu0 0.0
        %696 = vmatprep.subr.mxu0 0.0
        %697 = vmatpush1.msra.mxu0 0.0
        %698 = vmatprep.subr.mxu0 0.0
        %699 = vmatpush1.msra.mxu0 0.0
        %700 = vmatprep.subr.mxu0 0.0
        %701 = vmatpush1.msra.mxu0 0.0
        %702 = vmatprep.subr.mxu0 0.0
        %703 = vmatpush1.msra.mxu0 0.0
        %704 = vmatprep.subr.mxu0 0.0
        %705 = vmatpush1.msra.mxu0 0.0
        %706 = vmatprep.subr.mxu0 0.0
        %707 = vmatpush1.msra.mxu0 0.0
        %708 = vmatprep.subr.mxu0 0.0
        %709 = vmatpush1.msra.mxu0 0.0
        %710 = vmatprep.subr.mxu0 0.0
        %711 = vmatpush1.msra.mxu0 0.0
        %712 = vmatprep.subr.mxu0 0.0
        %713 = vmatpush1.msra.mxu0 0.0
        %714 = vmatprep.subr.mxu0 0.0
        %715 = vmatpush1.msra.mxu0 0.0
        %716 = vmatprep.subr.mxu0 0.0
        %717 = vmatpush1.msra.mxu0 0.0
        %718 = vmatprep.subr.mxu0 0.0
        %719 = vmatpush1.msra.mxu0 0.0
        %720 = vmatprep.subr.mxu0 0.0
        %721 = vmatpush1.msra.mxu0 0.0
        %722 = vmatprep.subr.mxu0 0.0
        %723 = vmatpush1.msra.mxu0 0.0
        %724 = vmatprep.subr.mxu0 0.0
        %725 = vmatpush1.msra.mxu0 0.0
        %726 = vmatprep.subr.mxu0 0.0
        %727 = vmatpush1.msra.mxu0 0.0
        %728 = vmatprep.subr.mxu0 0.0
        %729 = vmatpush1.msra.mxu0 0.0
        %730 = vmatprep.subr.mxu0 0.0
        %731 = vmatpush1.msra.mxu0 0.0
        %732 = vmatprep.subr.mxu0 0.0
        %733 = vmatpush1.msra.mxu0 0.0
        %734 = vmatprep.mubr.f32.mxu0 0.0
        %735 = vmatmul.mubr.f32.gmra.mrb[0].mxu0 %v643
        %v736 = vpop.f32.mrb[0].mxu0
        %v737 = vadd.f32 0.0, %v736
        %v738 = vpop.f32.mrb[0].mxu0
        %739 = vmatprep.mubr.f32.mxu0 0.0
        %740 = vmatmul.mubr.f32.gmra.mrb[0].mxu0 %v646
        %v741 = vpop.f32.mrb[0].mxu0
        %v742 = vadd.f32 0.0, %v741
        %v743 = vpop.f32.mrb[0].mxu0
        %744 = vmatprep.mubr.f32.mxu0 0.0
        %745 = vmatmul.mubr.f32.gmra.mrb[0].mxu0 %v649
        %v746 = vpop.f32.mrb[0].mxu0
        %v747 = vadd.f32 0.0, %v746
        %v748 = vpop.f32.mrb[0].mxu0
        %749 = vmatprep.mubr.f32.mxu0 0.0
        %750 = vmatmul.mubr.f32.gmra.mrb[0].mxu0 %v652
        %v751 = vpop.f32.mrb[0].mxu0
        %v752 = vadd.f32 0.0, %v751
        %v753 = vpop.f32.mrb[0].mxu0
        %754 = vmatprep.mubr.f32.mxu0 0.0
        %755 = vmatmul.mubr.f32.gmra.mrb[0].mxu0 %v655
        %v756 = vpop.f32.mrb[0].mxu0
        %v757 = vadd.f32 0.0, %v756
        %v758 = vpop.f32.mrb[0].mxu0
        %759 = vmatprep.mubr.f32.mxu0 0.0
        %760 = vmatmul.mubr.f32.gmra.mrb[0].mxu0 %v658
        %v761 = vpop.f32.mrb[0].mxu0
        %v762 = vadd.f32 0.0, %v761
        %v763 = vpop.f32.mrb[0].mxu0
        %764 = vmatprep.mubr.f32.mxu0 0.0
        %765 = vmatmul.mubr.f32.gmra.mrb[0].mxu0 %v661
        %v766 = vpop.f32.mrb[0].mxu0
        %v767 = vadd.f32 0.0, %v766
        %v768 = vpop.f32.mrb[0].mxu0
        %769 = vmatprep.mubr.f32.mxu0 0.0
        %770 = vmatmul.mubr.f32.gmra.mrb[0].mxu0 %v664
        %v771 = vpop.f32.mrb[0].mxu0
        %v772 = vadd.f32 0.0, %v771
        %v773 = vpop.f32.mrb[0].mxu0
        %774 = vdwg.mxu0
        %vm775 = vcmask 162816
        %776 = vst.msk [vmem:[%s249] sm:$0xff] %vm775, %v737
        %777 = vst.msk [vmem:[%s249 + $0x8] sm:$0xff] %vm775, %v742
        %778 = vst.msk [vmem:[%s249 + $0x10] sm:$0xff] %vm775, %v747
        %779 = vst.msk [vmem:[%s249 + $0x18] sm:$0xff] %vm775, %v752
        %780 = vst.msk [vmem:[%s249 + $0x20] sm:$0xff] %vm775, %v757
        %781 = vst.msk [vmem:[%s249 + $0x28] sm:$0xff] %vm775, %v762
        %782 = vst.msk [vmem:[%s249 + $0x30] sm:$0xff] %vm775, %v767
        %783 = vst.msk [vmem:[%s249 + $0x38] sm:$0xff] %vm775, %v772
        %s784 = smul.u32 8, %s20
        %p785 = scmp.lt.s32.totalorder %s784, 15
        %s786 = scalar_select %p785, %s784, 15
        %s787 = smul.addr %s786, 8
        %s788 = scalar_lea.vmem %s3, %s787
        %s789 = smul.u32 8, %s20
        %p790 = scmp.lt.s32.totalorder %s789, 15
        %s791 = scalar_select %p790, %s789, 15
        %s792 = smul.addr %s791, 8
        %s793 = scalar_lea.vmem %s4, %s792
        %s794 = sand.u32 %s153, 1
        %s795 = scalar_lea.sflag [#allocation3], %s794
        %s796 = sand.u32 %s153, 1
        %s797 = smul.addr %s796, 64
        %s798 = scalar_lea.vmem [#allocation2], %s797
        // Predicated region
        $region33: #{feature_emb_forward.1} parent=31 // pred_check
          %p799 = pneg %p111
        $region34: #{feature_emb_forward.1} parent=31 // pred_check_branch
          %801 = sbr.rel (%p799) target = $region36
        $region35: #{feature_emb_forward.1} parent=31 // pred_region
          %s802 = smul.u32 8, %s20
        $region36: #{feature_emb_forward.1} parent=31 // pred_fallthru
          _
        // Predicated region
        $region37: #{feature_emb_forward.1} parent=31 // pred_check
          %p803 = pneg %p137
        $region38: #{feature_emb_forward.1} parent=31 // pred_check_branch
          %805 = sbr.rel (%p803) target = $region40
        $region39: #{feature_emb_forward.1} parent=31 // pred_region
          %s806 = smul.u32 8, %s20
        $region40: #{feature_emb_forward.1} parent=31 // pred_fallthru
          _
        // Predicated region
        $region41: #{feature_emb_forward.1} parent=31 // pred_check
          %p807 = pneg %p163
        $region42: #{feature_emb_forward.1} parent=31 // pred_check_branch
          %809 = sbr.rel (%p807) target = $region44
        $region43: #{feature_emb_forward.1} parent=31 // pred_region
          %s810 = smul.u32 8, %s20
          %s812 = ssub.s32 1024, 1024
          %813 = vsyncadd %s795, %s812
          %s814 = smul.addr %s810, 128
          %s815 = scalar_lea.hbm %s5, %s814
          %s816 = sshll.u32 %s798, 4
          %s817 = int_to_ptr.vmem [resolvable:$true] %s816
          %822 = dma.vmem_to_hbm [thread:$0]  %s817, 1024, %s815, %s795, 128, 128, 8
        $region44: #{feature_emb_forward.1} parent=31 // pred_fallthru
          _
      $region32: #{feature_emb_forward.1} parent=5 // pred_fallthru
        _
      %p823 = scmp.le.s32.totalorder 2, %s15
      // Predicated region
      $region45: #{feature_emb_forward.1} parent=5 // pred_check
        %p824 = pneg %p823
      $region46: #{feature_emb_forward.1} parent=5 // pred_check_branch
        %826 = sbr.rel (%p824) target = $region48
      $region47: #{feature_emb_forward.1} parent=5 // pred_region
        %s827 = ssub.s32 %s15, 2
        // Predicated region
        $region49: #{feature_emb_forward.1} parent=47 // pred_check
          %p828 = pneg %p117
        $region50: #{feature_emb_forward.1} parent=47 // pred_check_branch
          %830 = sbr.rel (%p828) target = $region52
        $region51: #{feature_emb_forward.1} parent=47 // pred_region
          %s831 = smul.u32 8, %s21
          %p832 = scmp.lt.s32.totalorder %s831, 15
          %s833 = scalar_select %p832, %s831, 15
          %s834 = smul.addr %s833, 8
          %s835 = scalar_lea.vmem %s3, %s834
        $region52: #{feature_emb_forward.1} parent=47 // pred_fallthru
          _
        // Predicated region
        $region53: #{feature_emb_forward.1} parent=47 // pred_check
          %p836 = pneg %p143
        $region54: #{feature_emb_forward.1} parent=47 // pred_check_branch
          %838 = sbr.rel (%p836) target = $region56
        $region55: #{feature_emb_forward.1} parent=47 // pred_region
          %s839 = smul.u32 8, %s21
          %p840 = scmp.lt.s32.totalorder %s839, 15
          %s841 = scalar_select %p840, %s839, 15
          %s842 = smul.addr %s841, 8
          %s843 = scalar_lea.vmem %s4, %s842
        $region56: #{feature_emb_forward.1} parent=47 // pred_fallthru
          _
        // Predicated region
        $region57: #{feature_emb_forward.1} parent=47 // pred_check
          %p844 = pneg %p169
        $region58: #{feature_emb_forward.1} parent=47 // pred_check_branch
          %846 = sbr.rel (%p844) target = $region60
        $region59: #{feature_emb_forward.1} parent=47 // pred_region
          %s847 = sand.u32 %s154, 1
          %s848 = scalar_lea.sflag [#allocation3], %s847
          %s849 = sand.u32 %s154, 1
          %s850 = smul.addr %s849, 64
          %s851 = scalar_lea.vmem [#allocation2], %s850
          %852 = dma.done %s848, 1024
        $region60: #{feature_emb_forward.1} parent=47 // pred_fallthru
          _
      $region48: #{feature_emb_forward.1} parent=5 // pred_fallthru
        _
    $region6: #{feature_emb_forward.1} parent=1 // loop_footer
      %s19 = sadd.s32 1, %s15
    $region7: #{feature_emb_forward.1} parent=1 // loop_footer_branch
      %14 = sbr.rel target = $region3
    $region8: #{feature_emb_forward.1} parent=1 // loop_exit
      _
    %853 = vsyncpa [#allocation3], 1
    %s854 = scalar_lea.sflag [#allocation3], 1
    %855 = vsyncpa %s854, 1

</llo_original>
